<compile_context>
chip_gen: v7x
topology: tpu7x:2x2x1
jax: 0.10.0
libtpu: 0.0.40
codegen_flags: <defaults>
</compile_context>

<pallas_src>
import math
import functools

import jax
import jax.numpy as jnp
from jax.experimental import pallas as pl
from jax.experimental.pallas import tpu as pltpu

LANE = 128


# --------------------------------------------------------------------------
# Stage 1: fc1 matmul (+ folded bn1 / bias / bn2), D-parallel x K-reduction
# --------------------------------------------------------------------------
def fc1_kernel(x_ref, w_ref, b_ref, z_ref):
    """z[:, d_tile] = x @ w_eff[:, d_tile] + b_eff[d_tile]."""
    k = pl.program_id(1)

    @pl.when(k == 0)
    def _():
        z_ref[...] = jnp.zeros_like(z_ref)

    # MXU matmul; x already cast to the weight streaming dtype in the wrapper,
    # f32 accumulation into the resident output block.
    z_ref[...] += jnp.dot(x_ref[...], w_ref[...],
                          preferred_element_type=jnp.float32)

    @pl.when(k == pl.num_programs(1) - 1)
    def _():
        z_ref[...] += b_ref[...]


# --------------------------------------------------------------------------
# Stage 2: ArcModule — normalize + cosine logits, margin on the label column
# --------------------------------------------------------------------------
def arc_margin_kernel(labels_ref, z_ref, wnt_ref, logit_ref,
                      *, s, cos_m, sin_m, th, mm):
    j = pl.program_id(0)

    # F.normalize(z, dim=1) with eps=1e-12 on the norm == clamp sum-of-squares
    # at 1e-24 and use rsqrt (EUP).  Padded D columns of z are exactly zero so
    # the padded sum-of-squares equals the true one.  Recomputing this per
    # N-tile is O(B*D) and negligible vs. the (D, TN) weight stream.
    z = z_ref[...]
    inv = jax.lax.rsqrt(jnp.maximum(
        jnp.sum(z * z, axis=-1, keepdims=True), 1e-24))
    feats = (z * inv).astype(wnt_ref.dtype)

    cos_th = jnp.dot(feats, wnt_ref[...], preferred_element_type=jnp.float32)
    cos_th = jnp.clip(cos_th, -1.0, 1.0)

    b, tn = cos_th.shape
    cols = jax.lax.broadcasted_iota(jnp.int32, (b, tn), 1) + j * tn
    onehot = (cols == labels_ref[...]).astype(cos_th.dtype)     # scatter_(1, labels, 1)

    # Margin math only on the label column (B,1).  Rows whose label is not in
    # this N-tile have an all-zero onehot, so the correction is a no-op.
    cos_lab = jnp.sum(onehot * cos_th, axis=-1, keepdims=True)
    sin_lab = jnp.sqrt(jnp.maximum(1.0 - cos_lab * cos_lab, 0.0))
    cos_lab_m = cos_lab * cos_m - sin_lab * sin_m
    cos_lab_m = jnp.where(cos_lab > th, cos_lab_m, cos_lab - mm)

    logit_ref[...] = (cos_th + onehot * (cos_lab_m - cos_lab)) * s


# --------------------------------------------------------------------------
# Helpers
# --------------------------------------------------------------------------
def _round_up(x, m):
    return (x + m - 1) // m * m


def _round_dn_lane(x):
    return max(LANE, (x // LANE) * LANE)


def _pad2(a, rows, cols):
    r, c = a.shape
    if r == rows and c == cols:
        return a
    return jnp.pad(a, ((0, rows - r), (0, cols - c)))


def _tpu_vmem_capacity_bytes():
    """Physical VMEM per core, with a conservative fallback (v7x = 64 MiB)."""
    try:
        info = pltpu.get_tpu_info()
        for name in ("vmem_capacity_bytes", "vmem_size_bytes", "vmem_bytes"):
            v = getattr(info, name, None)
            if v:
                return int(v)
    except Exception:
        pass
    return 64 * 1024 * 1024


# --------------------------------------------------------------------------
# Wrapper
# --------------------------------------------------------------------------
def arcnet_forward(features_nchw, labels,
                   bn1_gamma, bn1_beta, bn1_mean, bn1_var,
                   w1, b1,
                   bn2_gamma, bn2_beta, bn2_mean, bn2_var,
                   arc_w, *, s=65.0, m=0.5, eps=1e-5,
                   weights_dtype=jnp.bfloat16,
                   target_tile_bytes=None, vmem_limit_bytes=None):
    B, C, H, W = features_nchw.shape
    K = C * H * W
    D = w1.shape[0]            # channel_size (nn.Linear weight is (D, K))
    N = arc_w.shape[0]         # num_outputs

    # ---- generation-aware budgets ------------------------------------------
    phys_vmem = _tpu_vmem_capacity_bytes()
    if vmem_limit_bytes is None:
        # ~3/4 of physical VMEM, capped at 96 MiB (v5e/v6e: 96 MiB; v7x: 48 MiB)
        vmem_limit_bytes = max(32 << 20, min(phys_vmem * 3 // 4, 96 << 20))
    if target_tile_bytes is None:
        # ~2-4 MiB per streamed weight tile: big enough that per-step DMA time
        # dominates the fixed ~0.35us pipeline overhead, small enough that the
        # double-buffered tiles stay far below the scoped-VMEM limit.
        target_tile_bytes = (4 << 20) if phys_vmem >= (96 << 20) else (2 << 20)

    wsz = jnp.dtype(weights_dtype).itemsize

    # ---- fold bn1 + fc1 bias + bn2 into a single affine on the weights ------
    bn1_scale = bn1_gamma / jnp.sqrt(bn1_var + eps)
    bn1_shift = bn1_beta - bn1_mean * bn1_scale
    bn1s = jnp.repeat(bn1_scale, H * W)                     # per-channel -> per-element (K,)
    bn1b = jnp.repeat(bn1_shift, H * W)                     # (K,)
    bn2_scale = bn2_gamma / jnp.sqrt(bn2_var + eps)         # (D,)
    bn2_shift = bn2_beta - bn2_mean * bn2_scale             # (D,)
    w1_t = w1.T                                             # (K, D)
    w_eff = (bn1s[:, None] * w1_t) * bn2_scale[None, :]     # (K, D)
    b_eff = ((bn1b @ w1_t + b1) * bn2_scale + bn2_shift)[None, :]   # (1, D), f32

    # ---- pre-normalize ArcModule weight, transpose -> lane-dense (D, N) -----
    wn = arc_w * jax.lax.rsqrt(jnp.maximum(
        jnp.sum(arc_w * arc_w, axis=-1, keepdims=True), 1e-24))
    wn_t = wn.T                                             # (D, N)

    # ---- tiling --------------------------------------------------------------
    D128 = _round_up(D, LANE)
    # Stage-1 parallel D axis: >=2 D tiles when possible so megacore (v7x)
    # splits the w_eff column stream across both TensorCores.
    n_d_tiles = 2 if D128 >= 2 * LANE else 1
    TD = _round_up(-(-D128 // n_d_tiles), LANE)
    DP = TD * n_d_tiles

    K128 = _round_up(K, LANE)
    TK = min(K128, _round_dn_lane(target_tile_bytes // max(TD * wsz, 1)))
    KP = _round_up(K128, TK)

    N128 = _round_up(N, LANE)
    TN = min(N128, _round_dn_lane(target_tile_bytes // max(DP * wsz, 1)))
    if N128 >= 2 * LANE:                       # keep >=2 N tiles for megacore
        TN = min(TN, _round_dn_lane(N128 // 2))
    NP = _round_up(N128, TN)

    # ---- pad + cast ----------------------------------------------------------
    x_p = _pad2(features_nchw.reshape(B, K), B, KP).astype(weights_dtype)
    w_eff_p = _pad2(w_eff, KP, DP).astype(weights_dtype)
    b_eff_p = _pad2(b_eff, 1, DP)                           # stays f32
    wn_t_p = _pad2(wn_t, DP, NP).astype(weights_dtype)
    labels2d = labels.reshape(B, 1).astype(jnp.int32)

    # ---- stage 1: fc1 (+ folded BN affines), D-parallel x K-reduction --------
    z = pl.pallas_call(
        fc1_kernel,
        out_shape=jax.ShapeDtypeStruct((B, DP), jnp.float32),
        grid_spec=pltpu.PrefetchScalarGridSpec(
            num_scalar_prefetch=0,
            grid=(DP // TD, KP // TK),
            in_specs=[pl.BlockSpec((B, TK), lambda d, k: (0, k)),
                      pl.BlockSpec((TK, TD), lambda d, k: (k, d)),
                      pl.BlockSpec((1, TD), lambda d, k: (0, d))],
            out_specs=pl.BlockSpec((B, TD), lambda d, k: (0, d))),
        compiler_params=pltpu.CompilerParams(
            dimension_semantics=("parallel", "arbitrary"),
            vmem_limit_bytes=vmem_limit_bytes),
    )(x_p, w_eff_p, b_eff_p)

    # Returned embedding: tiny O(B*D) normalize epilogue (padded cols of z are 0).
    feats_full = z * jax.lax.rsqrt(
        jnp.maximum(jnp.sum(z * z, axis=1, keepdims=True), 1e-24))

    # ---- stage 2: ArcModule logits, N-tiled (parallel -> megacore) -----------
    kernel = functools.partial(
        arc_margin_kernel,
        s=float(s), cos_m=math.cos(m), sin_m=math.sin(m),
        th=math.cos(math.pi - m), mm=math.sin(math.pi - m) * m)
    logits = pl.pallas_call(
        kernel,
        out_shape=jax.ShapeDtypeStruct((B, NP), jnp.float32),
        grid_spec=pltpu.PrefetchScalarGridSpec(
            num_scalar_prefetch=0,
            grid=(NP // TN,),
            in_specs=[pl.BlockSpec((B, 1), lambda j: (0, 0)),
                      pl.BlockSpec((B, DP), lambda j: (0, 0)),
                      pl.BlockSpec((DP, TN), lambda j: (0, j))],
            out_specs=pl.BlockSpec((B, TN), lambda j: (0, j))),
        compiler_params=pltpu.CompilerParams(
            dimension_semantics=("parallel",),
            vmem_limit_bytes=vmem_limit_bytes),
    )(labels2d, z, wn_t_p)

    return feats_full[:, :D], logits[:, :N]


# --------------------------------------------------------------------------
# Pure-JAX reference (PyTorch-equivalent f32 math)
# --------------------------------------------------------------------------
def arcnet_reference(features_nchw, labels,
                     bn1_gamma, bn1_beta, bn1_mean, bn1_var,
                     w1, b1,
                     bn2_gamma, bn2_beta, bn2_mean, bn2_var,
                     arc_w, *, s=65.0, m=0.5, eps=1e-5):
    B, C, H, W = features_nchw.shape
    N = arc_w.shape[0]
    x = features_nchw.reshape(B, -1)
    bn1_scale = bn1_gamma / jnp.sqrt(bn1_var + eps)
    bn1_shift = bn1_beta - bn1_mean * bn1_scale
    x = x * jnp.repeat(bn1_scale, H * W) + jnp.repeat(bn1_shift, H * W)
    z = x @ w1.T + b1
    z = z * (bn2_gamma / jnp.sqrt(bn2_var + eps)) + (
        bn2_beta - bn2_mean * bn2_gamma / jnp.sqrt(bn2_var + eps))
    feats = z / jnp.maximum(jnp.linalg.norm(z, axis=1, keepdims=True), 1e-12)
    wn = arc_w / jnp.maximum(jnp.linalg.norm(arc_w, axis=1, keepdims=True), 1e-12)
    cos = jnp.clip(feats @ wn.T, -1.0, 1.0)
    sin = jnp.sqrt(1.0 - cos * cos)
    ctm = cos * math.cos(m) - sin * math.sin(m)
    ctm = jnp.where(cos > math.cos(math.pi - m), ctm, cos - math.sin(math.pi - m) * m)
    onehot = jax.nn.one_hot(labels, N, dtype=cos.dtype)
    return feats, (onehot * ctm + (1.0 - onehot) * cos) * s


if __name__ == "__main__":
    # Small shapes consistent with the module:
    B, C, H, W = 8, 4, 8, 8          # backbone features (in_features=4, feature_size=8)
    D = 128                          # channel_size
    N = 16                           # num_outputs
    K = C * H * W

    key = jax.random.PRNGKey(0)
    ks = jax.random.split(key, 12)
    feats_in = jax.random.normal(ks[0], (B, C, H, W), jnp.float32)
    labels = jax.random.randint(ks[1], (B,), 0, N, jnp.int32)

    bn1_gamma = 1.0 + 0.1 * jax.random.normal(ks[2], (C,), jnp.float32)
    bn1_beta = 0.1 * jax.random.normal(ks[3], (C,), jnp.float32)
    bn1_mean = 0.1 * jax.random.normal(ks[4], (C,), jnp.float32)
    bn1_var = jnp.abs(1.0 + 0.1 * jax.random.normal(ks[5], (C,), jnp.float32))

    w1 = 0.02 * jax.random.normal(ks[6], (D, K), jnp.float32)       # nn.Linear(K, D)
    b1 = 0.01 * jax.random.normal(ks[7], (D,), jnp.float32)

    bn2_gamma = 1.0 + 0.1 * jax.random.normal(ks[8], (D,), jnp.float32)
    bn2_beta = 0.1 * jax.random.normal(ks[9], (D,), jnp.float32)
    bn2_mean = 0.1 * jax.random.normal(ks[10], (D,), jnp.float32)
    bn2_var = jnp.abs(1.0 + 0.1 * jax.random.normal(ks[11], (D,), jnp.float32))

    # ArcModule weight: xavier_normal_ on (out_features, in_features)
    xavier_std = math.sqrt(2.0 / (N + D))
    arc_w = xavier_std * jax.random.normal(jax.random.PRNGKey(42), (N, D), jnp.float32)

    args = (feats_in, labels,
            bn1_gamma, bn1_beta, bn1_mean, bn1_var,
            w1, b1,
            bn2_gamma, bn2_beta, bn2_mean, bn2_var,
            arc_w)

    ref_feats, ref_logits = arcnet_reference(*args, s=65.0, m=0.5)

    # --- f32 weights: strict check against the PyTorch-equivalent reference ---
    feats32, logits32 = arcnet_forward(*args, s=65.0, m=0.5,
                                       weights_dtype=jnp.float32)
    jax.block_until_ready((feats32, logits32))
    assert feats32.shape == (B, D) and logits32.shape == (B, N)
    assert jnp.allclose(feats32, ref_feats, atol=2e-3, rtol=2e-3)
    assert jnp.allclose(logits32, ref_logits, atol=5e-2, rtol=2e-3)

    # --- bf16 weight streaming (production default): looser tolerances --------
    feats16, logits16 = arcnet_forward(*args, s=65.0, m=0.5,
                                       weights_dtype=jnp.bfloat16)
    jax.block_until_ready((feats16, logits16))
    assert feats16.shape == (B, D) and logits16.shape == (B, N)
    assert jnp.allclose(feats16, ref_feats, atol=8e-3, rtol=1e-2)
    assert jnp.allclose(logits16, ref_logits, atol=3.5e-1, rtol=2e-2)

    print("KERNEL_OK")
</pallas_src>

<mosaic_0001>
module attributes {stable_mosaic.version = 11 : i64} {
  func.func @fc1_kernel(%arg0: i32, %arg1: i32, %arg2: memref<8x256xf32, #tpu.memory_space<vmem>>, %arg3: memref<256x128xf32, #tpu.memory_space<vmem>>, %arg4: memref<1x128xf32, #tpu.memory_space<vmem>>, %arg5: memref<8x128xf32, #tpu.memory_space<vmem>>) attributes {dimension_semantics = [#tpu.dimension_semantics<parallel>, #tpu.dimension_semantics<arbitrary>], iteration_bounds = array<i64: 1, 1>, scalar_prefetch = 0 : i64, scratch_operands = 0 : i64, tpu.core_type = #tpu.core_type<tc>, window_params = [{transform_indices = @transform_0, window_bounds = array<i64: 8, 256>}, {transform_indices = @transform_1, window_bounds = array<i64: 256, 128>}, {transform_indices = @transform_2, window_bounds = array<i64: 1, 128>}, {transform_indices = @transform_3, window_bounds = array<i64: 8, 128>}]} {
    %c0_i32 = arith.constant 0 : i32
    %0 = arith.cmpi eq, %arg1, %c0_i32 : i32
    %1 = arith.extui %0 : i1 to i32
    %c0_i32_0 = arith.constant 0 : i32
    %2 = arith.cmpi ne, %1, %c0_i32_0 : i32
    scf.if %2 {
      %cst_10 = arith.constant 0.000000e+00 : f32
      %12 = vector.broadcast %cst_10 : f32 to vector<8x128xf32>
      %c0_11 = arith.constant 0 : index
      %c0_12 = arith.constant 0 : index
      %13 = vector.load %arg5[%c0_11, %c0_12] : memref<8x128xf32, #tpu.memory_space<vmem>>, vector<8x128xf32>
      tpu.vector_store %arg5[%c0_11, %c0_12], %12 {strides = array<i32>} : memref<8x128xf32, #tpu.memory_space<vmem>>, vector<8x128xf32>,
    } else {
    }
    %c0 = arith.constant 0 : index
    %c0_1 = arith.constant 0 : index
    %3 = vector.load %arg5[%c0, %c0_1] : memref<8x128xf32, #tpu.memory_space<vmem>>, vector<8x128xf32>
    %c0_2 = arith.constant 0 : index
    %c0_3 = arith.constant 0 : index
    %4 = vector.load %arg2[%c0_2, %c0_3] : memref<8x256xf32, #tpu.memory_space<vmem>>, vector<8x256xf32>
    %c0_4 = arith.constant 0 : index
    %c0_5 = arith.constant 0 : index
    %5 = vector.load %arg3[%c0_4, %c0_5] : memref<256x128xf32, #tpu.memory_space<vmem>>, vector<256x128xf32>
    %cst = arith.constant dense<0.000000e+00> : vector<8x128xf32>
    %6 = tpu.matmul %4, %5, %cst {dimension_numbers = #tpu.dot_dimension_numbers<[1], [0], [0], [1], [0, 0, 1, 1], [], []>} : vector<8x256xf32>, vector<256x128xf32>, vector<8x128xf32> -> vector<8x128xf32>
    %7 = arith.addf %3, %6 : vector<8x128xf32>
    %c0_6 = arith.constant 0 : index
    %c0_7 = arith.constant 0 : index
    %8 = vector.load %arg5[%c0_6, %c0_7] : memref<8x128xf32, #tpu.memory_space<vmem>>, vector<8x128xf32>
    tpu.vector_store %arg5[%c0_6, %c0_7], %7 {strides = array<i32>} : memref<8x128xf32, #tpu.memory_space<vmem>>, vector<8x128xf32>,
    %c0_i32_8 = arith.constant 0 : i32
    %9 = arith.cmpi eq, %arg1, %c0_i32_8 : i32
    %10 = arith.extui %9 : i1 to i32
    %c0_i32_9 = arith.constant 0 : i32
    %11 = arith.cmpi ne, %10, %c0_i32_9 : i32
    scf.if %11 {
      %c0_10 = arith.constant 0 : index
      %c0_11 = arith.constant 0 : index
      %12 = vector.load %arg5[%c0_10, %c0_11] : memref<8x128xf32, #tpu.memory_space<vmem>>, vector<8x128xf32>
      %c0_12 = arith.constant 0 : index
      %c0_13 = arith.constant 0 : index
      %13 = vector.load %arg4[%c0_12, %c0_13] : memref<1x128xf32, #tpu.memory_space<vmem>>, vector<1x128xf32>
      %14 = vector.broadcast %13 : vector<1x128xf32> to vector<8x128xf32>
      %15 = arith.addf %12, %14 : vector<8x128xf32>
      %c0_14 = arith.constant 0 : index
      %c0_15 = arith.constant 0 : index
      %16 = vector.load %arg5[%c0_14, %c0_15] : memref<8x128xf32, #tpu.memory_space<vmem>>, vector<8x128xf32>
      tpu.vector_store %arg5[%c0_14, %c0_15], %15 {strides = array<i32>} : memref<8x128xf32, #tpu.memory_space<vmem>>, vector<8x128xf32>,
    } else {
    }
    return
  }
  func.func @transform_0(%arg0: i32, %arg1: i32) -> (i32, i32) {
    %c0_i32 = arith.constant 0 : i32
    %c0_i32_0 = arith.constant 0 : i32
    return %c0_i32, %arg1 : i32, i32
  }
  func.func @transform_1(%arg0: i32, %arg1: i32) -> (i32, i32) {
    %c0_i32 = arith.constant 0 : i32
    return %arg1, %arg0 : i32, i32
  }
  func.func @transform_2(%arg0: i32, %arg1: i32) -> (i32, i32) {
    %c0_i32 = arith.constant 0 : i32
    %c0_i32_0 = arith.constant 0 : i32
    return %c0_i32, %arg0 : i32, i32
  }
  func.func @transform_3(%arg0: i32, %arg1: i32) -> (i32, i32) {
    %c0_i32 = arith.constant 0 : i32
    %c0_i32_0 = arith.constant 0 : i32
    return %c0_i32, %arg0 : i32, i32
  }
}

</mosaic_0001>

<llo_original>
// kernel: tpu_custom_call.1
$region0: #{tpu_custom_call.1}
  #allocation0 [shape = 'u32[]', space=smem, size = 0x4, offset = 0x4, fixed_abs, tag = 'smem constant byte address 0x4 - core index']
  #allocation1 [shape = 'u32[144,128]{1,0:T(1,128)}', space=vmem, size = 0x12000, scoped, tag = 'internal scratch']
  %s0 = inlined_call_operand.hbm [shape: f32[8,256], index: 0, kind: input, shape index: {}]
  %s1 = inlined_call_operand.hbm [shape: f32[256,128], index: 1, kind: input, shape index: {}]
  %s2 = inlined_call_operand.vmem [shape: f32[1,128], index: 2, kind: input, shape index: {}]
  %s3 = inlined_call_operand.hbm [shape: f32[8,128], index: 3, kind: output, shape index: {}]
  %s4 = sld [smem:[#allocation0]]
  $region38: #{tpu_custom_call.1} parent=0
    _
  %s6 = ssub.s32 1, %s4
  %s7 = scalar_select 0, %s6, %s4
  $region1: #{tpu_custom_call.1} parent=0
    #allocation2 [shape = 'u8[8192]{0}', space=vmem, size = 0x2000, scoped, tag = 'input window, operand 0, single buffered']
    #allocation3 [shape = 's32[1]{0}', space=sflag, size = 0x4, scoped, tag = 'scoped memory for tpu_custom_call.1']
    #allocation4 [shape = 's32[1]{0}', space=sflag, size = 0x4, scoped, tag = 'scoped memory for tpu_custom_call.1']
    #allocation5 [shape = 'u8[131072]{0}', space=vmem, size = 0x20000, scoped, tag = 'input window, operand 1, single buffered']
    #allocation6 [shape = 's32[1]{0}', space=sflag, size = 0x4, scoped, tag = 'scoped memory for tpu_custom_call.1']
    #allocation7 [shape = 'u8[4096]{0}', space=vmem, size = 0x1000, scoped, tag = 'output window, operand 0, single buffered']
    %8 = vsyncpa [#allocation3], 0
    %9 = vsyncpa [#allocation6], 0
    %10 = vsyncpa [#allocation4], 0
    // Predicated region
    $region2: #{tpu_custom_call.1} parent=1 // pred_check
      _
    $region3: #{tpu_custom_call.1} parent=1 // pred_check_branch
      %12 = sbr.rel (0) target = $region5
    $region4: #{tpu_custom_call.1} parent=1 // pred_region
      %s14 = ssub.s32 256, 256
      %15 = vsyncadd [#allocation3], %s14
      %s17 = sshll.u32 [#allocation2], 4
      %s18 = int_to_ptr.vmem [resolvable:$true] %s17
      %20 = dma.hbm_to_vmem [thread:$0]  %s0, 256, %s18, [#allocation3]
    $region5: #{tpu_custom_call.1} parent=1 // pred_fallthru
      _
    // Predicated region
    $region6: #{tpu_custom_call.1} parent=1 // pred_check
      _
    $region7: #{tpu_custom_call.1} parent=1 // pred_check_branch
      %22 = sbr.rel (0) target = $region9
    $region8: #{tpu_custom_call.1} parent=1 // pred_region
      %s24 = ssub.s32 4096, 4096
      %25 = vsyncadd [#allocation6], %s24
      %s26 = sshll.u32 [#allocation5], 4
      %s27 = int_to_ptr.vmem [resolvable:$true] %s26
      %32 = dma.hbm_to_vmem [thread:$0]  %s1, 4096, %s27, [#allocation6], 128, 128, 8
    $region9: #{tpu_custom_call.1} parent=1 // pred_fallthru
      _
    // Predicated region
    $region10: #{tpu_custom_call.1} parent=1 // pred_check
      _
    $region11: #{tpu_custom_call.1} parent=1 // pred_check_branch
      %34 = sbr.rel (0) target = $region13
    $region12: #{tpu_custom_call.1} parent=1 // pred_region
      _
    $region13: #{tpu_custom_call.1} parent=1 // pred_fallthru
      _
    // Predicated region
    $region14: #{tpu_custom_call.1} parent=1 // pred_check
      _
    $region15: #{tpu_custom_call.1} parent=1 // pred_check_branch
      %36 = sbr.rel (0) target = $region17
    $region16: #{tpu_custom_call.1} parent=1 // pred_region
      %37 = dma.done [#allocation3], 256
    $region17: #{tpu_custom_call.1} parent=1 // pred_fallthru
      _
    // Predicated region
    $region18: #{tpu_custom_call.1} parent=1 // pred_check
      _
    $region19: #{tpu_custom_call.1} parent=1 // pred_check_branch
      %39 = sbr.rel (0) target = $region21
    $region20: #{tpu_custom_call.1} parent=1 // pred_region
      %40 = dma.done [#allocation6], 4096
    $region21: #{tpu_custom_call.1} parent=1 // pred_fallthru
      _
    %p41 = scmp.eq.s32.totalorder 0, 0
    // Predicated region
    $region22: #{tpu_custom_call.1} parent=1 // pred_check
      %p42 = pneg %p41
    $region23: #{tpu_custom_call.1} parent=1 // pred_check_branch
      %44 = sbr.rel (%p42) target = $region25
    $region24: #{tpu_custom_call.1} parent=1 // pred_region
      %45 = vst [vmem:[#allocation7] sm:$0xff] 0.0
    $region25: #{tpu_custom_call.1} parent=1 // pred_fallthru
      _
    %v46 = vld [vmem:[#allocation7] sm:$0xff]
    %v47 = vld [vmem:[#allocation2] sm:$0xff]
    %v48 = vld [vmem:[#allocation2 + $0x8] sm:$0xff]
    %v49 = vld [vmem:[#allocation5] sm:$0xff]
    %v50 = vld [vmem:[#allocation5 + $0x8] sm:$0xff]
    %v51 = vld [vmem:[#allocation5 + $0x10] sm:$0xff]
    %v52 = vld [vmem:[#allocation5 + $0x18] sm:$0xff]
    %v53 = vld [vmem:[#allocation5 + $0x20] sm:$0xff]
    %v54 = vld [vmem:[#allocation5 + $0x28] sm:$0xff]
    %v55 = vld [vmem:[#allocation5 + $0x30] sm:$0xff]
    %v56 = vld [vmem:[#allocation5 + $0x38] sm:$0xff]
    %v57 = vld [vmem:[#allocation5 + $0x40] sm:$0xff]
    %v58 = vld [vmem:[#allocation5 + $0x48] sm:$0xff]
    %v59 = vld [vmem:[#allocation5 + $0x50] sm:$0xff]
    %v60 = vld [vmem:[#allocation5 + $0x58] sm:$0xff]
    %v61 = vld [vmem:[#allocation5 + $0x60] sm:$0xff]
    %v62 = vld [vmem:[#allocation5 + $0x68] sm:$0xff]
    %v63 = vld [vmem:[#allocation5 + $0x70] sm:$0xff]
    %v64 = vld [vmem:[#allocation5 + $0x78] sm:$0xff]
    %v65 = vld [vmem:[#allocation5 + $0x80] sm:$0xff]
    %v66 = vld [vmem:[#allocation5 + $0x88] sm:$0xff]
    %v67 = vld [vmem:[#allocation5 + $0x90] sm:$0xff]
    %v68 = vld [vmem:[#allocation5 + $0x98] sm:$0xff]
    %v69 = vld [vmem:[#allocation5 + $0xa0] sm:$0xff]
    %v70 = vld [vmem:[#allocation5 + $0xa8] sm:$0xff]
    %v71 = vld [vmem:[#allocation5 + $0xb0] sm:$0xff]
    %v72 = vld [vmem:[#allocation5 + $0xb8] sm:$0xff]
    %v73 = vld [vmem:[#allocation5 + $0xc0] sm:$0xff]
    %v74 = vld [vmem:[#allocation5 + $0xc8] sm:$0xff]
    %v75 = vld [vmem:[#allocation5 + $0xd0] sm:$0xff]
    %v76 = vld [vmem:[#allocation5 + $0xd8] sm:$0xff]
    %v77 = vld [vmem:[#allocation5 + $0xe0] sm:$0xff]
    %v78 = vld [vmem:[#allocation5 + $0xe8] sm:$0xff]
    %v79 = vld [vmem:[#allocation5 + $0xf0] sm:$0xff]
    %v80 = vld [vmem:[#allocation5 + $0xf8] sm:$0xff]
    %81 = vmatprep.subr.mxu0 0.0
    %82 = vmatpush1.msra.mxu0 %v49
    %83 = vmatprep.subr.mxu0 0.0
    %84 = vmatpush1.msra.mxu0 %v50
    %85 = vmatprep.subr.mxu0 0.0
    %86 = vmatpush1.msra.mxu0 %v51
    %87 = vmatprep.subr.mxu0 0.0
    %88 = vmatpush1.msra.mxu0 %v52
    %89 = vmatprep.subr.mxu0 0.0
    %90 = vmatpush1.msra.mxu0 %v53
    %91 = vmatprep.subr.mxu0 0.0
    %92 = vmatpush1.msra.mxu0 %v54
    %93 = vmatprep.subr.mxu0 0.0
    %94 = vmatpush1.msra.mxu0 %v55
    %95 = vmatprep.subr.mxu0 0.0
    %96 = vmatpush1.msra.mxu0 %v56
    %97 = vmatprep.subr.mxu0 0.0
    %98 = vmatpush1.msra.mxu0 %v57
    %99 = vmatprep.subr.mxu0 0.0
    %100 = vmatpush1.msra.mxu0 %v58
    %101 = vmatprep.subr.mxu0 0.0
    %102 = vmatpush1.msra.mxu0 %v59
    %103 = vmatprep.subr.mxu0 0.0
    %104 = vmatpush1.msra.mxu0 %v60
    %105 = vmatprep.subr.mxu0 0.0
    %106 = vmatpush1.msra.mxu0 %v61
    %107 = vmatprep.subr.mxu0 0.0
    %108 = vmatpush1.msra.mxu0 %v62
    %109 = vmatprep.subr.mxu0 0.0
    %110 = vmatpush1.msra.mxu0 %v63
    %111 = vmatprep.subr.mxu0 0.0
    %112 = vmatpush1.msra.mxu0 %v64
    %113 = vmatprep.subr.mxu0 0.0
    %114 = vmatpush1.msra.mxu0 %v65
    %115 = vmatprep.subr.mxu0 0.0
    %116 = vmatpush1.msra.mxu0 %v66
    %117 = vmatprep.subr.mxu0 0.0
    %118 = vmatpush1.msra.mxu0 %v67
    %119 = vmatprep.subr.mxu0 0.0
    %120 = vmatpush1.msra.mxu0 %v68
    %121 = vmatprep.subr.mxu0 0.0
    %122 = vmatpush1.msra.mxu0 %v69
    %123 = vmatprep.subr.mxu0 0.0
    %124 = vmatpush1.msra.mxu0 %v70
    %125 = vmatprep.subr.mxu0 0.0
    %126 = vmatpush1.msra.mxu0 %v71
    %127 = vmatprep.subr.mxu0 0.0
    %128 = vmatpush1.msra.mxu0 %v72
    %129 = vmatprep.subr.mxu0 0.0
    %130 = vmatpush1.msra.mxu0 %v73
    %131 = vmatprep.subr.mxu0 0.0
    %132 = vmatpush1.msra.mxu0 %v74
    %133 = vmatprep.subr.mxu0 0.0
    %134 = vmatpush1.msra.mxu0 %v75
    %135 = vmatprep.subr.mxu0 0.0
    %136 = vmatpush1.msra.mxu0 %v76
    %137 = vmatprep.subr.mxu0 0.0
    %138 = vmatpush1.msra.mxu0 %v77
    %139 = vmatprep.subr.mxu0 0.0
    %140 = vmatpush1.msra.mxu0 %v78
    %141 = vmatprep.subr.mxu0 0.0
    %142 = vmatpush1.msra.mxu0 %v79
    %143 = vmatprep.subr.mxu0 0.0
    %144 = vmatpush1.msra.mxu0 %v80
    %145 = vmatprep.mubr.f32.mxu0 %v48
    %146 = vmatmul.mubr.f32.gmra.mrb[0].mxu0 %v47
    %v147 = vpop.f32.mrb[0].mxu0
    %v148 = vadd.f32 0.0, %v147
    %v149 = vpop.f32.mrb[0].mxu0
    %150 = vdwg.mxu0
    %v151 = vadd.f32 %v46, %v148
    %152 = vst [vmem:[#allocation7] sm:$0xff] %v151
    // Predicated region
    $region26: #{tpu_custom_call.1} parent=1 // pred_check
      %p153 = pneg %p41
    $region27: #{tpu_custom_call.1} parent=1 // pred_check_branch
      %155 = sbr.rel (%p153) target = $region29
    $region28: #{tpu_custom_call.1} parent=1 // pred_region
      %v156 = vld [vmem:[#allocation7] sm:$0xff]
      %v157 = vld [vmem:[%s2] sm:$0x1]
      %v159 = vlaneseq
      %v160 = vshrl.u32 %v159, 7
      %v161 = vsub.s32 0, %v160
      %v162 = vrot.slane %v157, %v161
      %v164 = vadd.f32 %v156, %v162
      %165 = vst [vmem:[#allocation7] sm:$0xff] %v164
    $region29: #{tpu_custom_call.1} parent=1 // pred_fallthru
      _
    // Predicated region
    $region30: #{tpu_custom_call.1} parent=1 // pred_check
      _
    $region31: #{tpu_custom_call.1} parent=1 // pred_check_branch
      %167 = sbr.rel (0) target = $region33
    $region32: #{tpu_custom_call.1} parent=1 // pred_region
      %s169 = ssub.s32 128, 128
      %170 = vsyncadd [#allocation4], %s169
      %s172 = sshll.u32 [#allocation7], 4
      %s173 = int_to_ptr.vmem [resolvable:$true] %s172
      %175 = dma.vmem_to_hbm [thread:$0]  %s173, 128, %s3, [#allocation4]
    $region33: #{tpu_custom_call.1} parent=1 // pred_fallthru
      _
    // Predicated region
    $region34: #{tpu_custom_call.1} parent=1 // pred_check
      _
    $region35: #{tpu_custom_call.1} parent=1 // pred_check_branch
      %177 = sbr.rel (0) target = $region37
    $region36: #{tpu_custom_call.1} parent=1 // pred_region
      %178 = dma.done [#allocation4], 128
    $region37: #{tpu_custom_call.1} parent=1 // pred_fallthru
      _
    %179 = vsyncpa [#allocation3], 1
    %180 = vsyncpa [#allocation6], 1
    %181 = vsyncpa [#allocation4], 1

</llo_original>
